<compile_context>
chip_gen: v7x
topology: tpu7x:2x2x1
jax: 0.10.0
libtpu: 0.0.40
codegen_flags: <defaults>
</compile_context>

<pallas_src>
import jax
import jax.numpy as jnp
from jax import lax
from jax.experimental import pallas as pl
from jax.experimental.pallas import tpu as pltpu


def _round_up(x, m):
    return (x + m - 1) // m * m


def _score_kernel(ids_ref, emb_ref, o_ref):
    ids = ids_ref[...]              # (2*bp, 1) int32: [input ids ; context ids]
    emb = emb_ref[...]              # (Vp, Dp) float32

    n = ids.shape[0]                # 2*bp
    vp = emb.shape[0]
    bp = n // 2

    # One-hot gather on the MXU: onehot[r, v] = (ids[r] == v).
    vocab_iota = lax.broadcasted_iota(jnp.int32, (n, vp), 1)
    onehot = (vocab_iota == ids).astype(jnp.float32)                 # (2*bp, Vp)

    # Single fused gather matmul for both input and context embeddings.
    g = jnp.dot(onehot, emb, preferred_element_type=jnp.float32)     # (2*bp, Dp)
    e_in = g[:bp]                    # (bp, Dp)  — sublane-aligned split
    e_ctx = g[bp:]                   # (bp, Dp)

    # Per-row dot product: VPU multiply + XLU lane reduce.
    s = jnp.sum(e_in * e_ctx, axis=-1, keepdims=True)                # (bp, 1)

    # F.logsigmoid(x) = min(x, 0) - log1p(exp(-|x|))   (numerically stable)
    o_ref[...] = jnp.minimum(s, 0.0) - jnp.log1p(jnp.exp(-jnp.abs(s)))


def prepare_embedding(emb_table):
    """One-time (model-init) padding of the table: V->mult of 128, D->mult of 128."""
    V, D = emb_table.shape
    vp = _round_up(V, 128)
    dp = _round_up(D, 128)
    return jnp.zeros((vp, dp), jnp.float32).at[:V, :D].set(
        emb_table.astype(jnp.float32))


def skipgram_score(input_ids, context_ids, emb_padded):
    """input_ids, context_ids: int (B,);  emb_padded: float32 (Vp, Dp) -> (B, 1)."""
    B = input_ids.shape[0]
    vp, dp = emb_padded.shape
    bp = _round_up(B, 8)            # f32 sublane granule; padded rows gather row 0

    ids = jnp.zeros((2 * bp, 1), jnp.int32)
    ids = ids.at[:B, 0].set(input_ids.astype(jnp.int32))
    ids = ids.at[bp:bp + B, 0].set(context_ids.astype(jnp.int32))

    out = pl.pallas_call(
        _score_kernel,
        out_shape=jax.ShapeDtypeStruct((bp, 1), jnp.float32),
        grid=(1,),
        in_specs=[
            pl.BlockSpec((2 * bp, 1), lambda i: (0, 0)),
            pl.BlockSpec((vp, dp), lambda i: (0, 0)),
        ],
        out_specs=pl.BlockSpec((bp, 1), lambda i: (0, 0)),
        compiler_params=pltpu.CompilerParams(
            dimension_semantics=("arbitrary",)),
    )(ids, emb_padded)

    # Strip batch padding; torch-shaped (B, 1) result.
    return out[:B]


def _reference(input_ids, context_ids, emb_table):
    e_in = emb_table[input_ids]      # (B, D)
    e_ctx = emb_table[context_ids]   # (B, D)
    s = jnp.sum(e_in * e_ctx, axis=-1, keepdims=True)
    return jax.nn.log_sigmoid(s)


if __name__ == "__main__":
    VOCAB = 50
    EMB_DIM = 100          # fixed by the torch .view(batch, 1, 100)
    BATCH = 8

    key = jax.random.PRNGKey(0)
    k_emb, k_in, k_ctx = jax.random.split(key, 3)

    # nn.Embedding default init: N(0, 1)
    emb_table = jax.random.normal(k_emb, (VOCAB, EMB_DIM), dtype=jnp.float32)
    input_ids = jax.random.randint(k_in, (BATCH,), 0, VOCAB, dtype=jnp.int32)
    context_ids = jax.random.randint(k_ctx, (BATCH,), 0, VOCAB, dtype=jnp.int32)

    emb_padded = prepare_embedding(emb_table)   # done once, at "model init"

    out = skipgram_score(input_ids, context_ids, emb_padded)
    out = jax.block_until_ready(out)

    ref = _reference(input_ids, context_ids, emb_table)
    assert out.shape == (BATCH, 1)
    assert jnp.allclose(out, ref, atol=1e-4, rtol=1e-4), "mismatch vs reference"

    print("KERNEL_OK")
</pallas_src>

<mosaic_0001>
module attributes {stable_mosaic.version = 11 : i64} {
  func.func @_score_kernel(%arg0: i32, %arg1: memref<16x1xi32, #tpu.memory_space<vmem>>, %arg2: memref<128x128xf32, #tpu.memory_space<vmem>>, %arg3: memref<8x1xf32, #tpu.memory_space<vmem>>) attributes {dimension_semantics = [#tpu.dimension_semantics<arbitrary>], iteration_bounds = array<i64: 1>, scalar_prefetch = 0 : i64, scratch_operands = 0 : i64, tpu.core_type = #tpu.core_type<tc>, window_params = [{pipeline_mode = #tpu.pipeline_mode<synchronous>, transform_indices = @transform_0, window_bounds = array<i64: 16, 1>}, {pipeline_mode = #tpu.pipeline_mode<synchronous>, transform_indices = @transform_1, window_bounds = array<i64: 128, 128>}, {pipeline_mode = #tpu.pipeline_mode<synchronous>, transform_indices = @transform_2, window_bounds = array<i64: 8, 1>}]} {
    %c0 = arith.constant 0 : index
    %c0_0 = arith.constant 0 : index
    %0 = vector.load %arg1[%c0, %c0_0] : memref<16x1xi32, #tpu.memory_space<vmem>>, vector<16x1xi32>
    %c0_1 = arith.constant 0 : index
    %c0_2 = arith.constant 0 : index
    %1 = vector.load %arg2[%c0_1, %c0_2] : memref<128x128xf32, #tpu.memory_space<vmem>>, vector<128x128xf32>
    %2 = tpu.iota {dimensions = array<i32: 1>} : vector<16x128xi32>
    %3 = vector.broadcast %0 : vector<16x1xi32> to vector<16x128xi32>
    %4 = arith.cmpi eq, %2, %3 : vector<16x128xi32>
    %5 = arith.extui %4 : vector<16x128xi1> to vector<16x128xi32>
    %6 = arith.sitofp %5 : vector<16x128xi32> to vector<16x128xf32>
    %cst = arith.constant dense<0.000000e+00> : vector<16x128xf32>
    %7 = tpu.matmul %6, %1, %cst {dimension_numbers = #tpu.dot_dimension_numbers<[1], [0], [0], [1], [0, 0, 1, 1], [], []>} : vector<16x128xf32>, vector<128x128xf32>, vector<16x128xf32> -> vector<16x128xf32>
    %8 = vector.extract_strided_slice %7 {offsets = [0, 0], sizes = [8, 128], strides = [1, 1]} : vector<16x128xf32> to vector<8x128xf32>
    %9 = vector.extract_strided_slice %7 {offsets = [8, 0], sizes = [8, 128], strides = [1, 1]} : vector<16x128xf32> to vector<8x128xf32>
    %10 = arith.mulf %8, %9 : vector<8x128xf32>
    %cst_3 = arith.constant dense<0.000000e+00> : vector<8xf32>
    %11 = vector.multi_reduction <add>, %10, %cst_3 [1] : vector<8x128xf32> to vector<8xf32>
    %12 = vector.shape_cast %11 : vector<8xf32> to vector<8x1xf32>
    %cst_4 = arith.constant 0.000000e+00 : f32
    %13 = vector.broadcast %cst_4 : f32 to vector<8x1xf32>
    %14 = arith.minimumf %12, %13 : vector<8x1xf32>
    %15 = math.absf %12 : vector<8x1xf32>
    %cst_5 = arith.constant 0.000000e+00 : f32
    %16 = vector.broadcast %cst_5 : f32 to vector<8x1xf32>
    %17 = arith.subf %16, %15 : vector<8x1xf32>
    %18 = math.exp %17 : vector<8x1xf32>
    %19 = math.log1p %18 : vector<8x1xf32>
    %20 = arith.subf %14, %19 : vector<8x1xf32>
    %c0_6 = arith.constant 0 : index
    %c0_7 = arith.constant 0 : index
    %21 = vector.load %arg3[%c0_6, %c0_7] : memref<8x1xf32, #tpu.memory_space<vmem>>, vector<8x1xf32>
    tpu.vector_store %arg3[%c0_6, %c0_7], %20 {strides = array<i32>} : memref<8x1xf32, #tpu.memory_space<vmem>>, vector<8x1xf32>,
    return
  }
  func.func @transform_0(%arg0: i32) -> (i32, i32) {
    %c0_i32 = arith.constant 0 : i32
    %c0_i32_0 = arith.constant 0 : i32
    %c0_i32_1 = arith.constant 0 : i32
    return %c0_i32, %c0_i32_0 : i32, i32
  }
  func.func @transform_1(%arg0: i32) -> (i32, i32) {
    %c0_i32 = arith.constant 0 : i32
    %c0_i32_0 = arith.constant 0 : i32
    %c0_i32_1 = arith.constant 0 : i32
    return %c0_i32, %c0_i32_0 : i32, i32
  }
  func.func @transform_2(%arg0: i32) -> (i32, i32) {
    %c0_i32 = arith.constant 0 : i32
    %c0_i32_0 = arith.constant 0 : i32
    %c0_i32_1 = arith.constant 0 : i32
    return %c0_i32, %c0_i32_0 : i32, i32
  }
}

</mosaic_0001>

<llo_original>
// kernel: tpu_custom_call.1
$region0: #{tpu_custom_call.1}
  #allocation0 [shape = 'u32[]', space=smem, size = 0x4, offset = 0x4, fixed_abs, tag = 'smem constant byte address 0x4 - core index']
  #allocation1 [shape = 'u32[144,128]{1,0:T(1,128)}', space=vmem, size = 0x12000, scoped, tag = 'internal scratch']
  %s0 = inlined_call_operand.vmem [shape: s32[16,1], index: 0, kind: input, shape index: {}]
  %s1 = inlined_call_operand.hbm [shape: f32[128,128], index: 1, kind: input, shape index: {}]
  %s2 = inlined_call_operand.vmem [shape: f32[8,1], index: 2, kind: output, shape index: {}]
  %s3 = sld [smem:[#allocation0]]
  $region22: #{tpu_custom_call.1} parent=0
    _
  %s5 = ssub.s32 1, %s3
  %s6 = scalar_select 0, %s5, %s3
  $region1: #{tpu_custom_call.1} parent=0
    #allocation2 [shape = 'u8[65536]{0}', space=vmem, size = 0x10000, scoped, tag = 'input window, operand 1, single buffered']
    #allocation3 [shape = 's32[1]{0}', space=sflag, size = 0x4, scoped, tag = 'scoped memory for tpu_custom_call.1']
    %7 = vsyncpa [#allocation3], 0
    // Predicated region
    $region2: #{tpu_custom_call.1} parent=1 // pred_check
      _
    $region3: #{tpu_custom_call.1} parent=1 // pred_check_branch
      %9 = sbr.rel (0) target = $region5
    $region4: #{tpu_custom_call.1} parent=1 // pred_region
      _
    $region5: #{tpu_custom_call.1} parent=1 // pred_fallthru
      _
    // Predicated region
    $region6: #{tpu_custom_call.1} parent=1 // pred_check
      _
    $region7: #{tpu_custom_call.1} parent=1 // pred_check_branch
      %11 = sbr.rel (0) target = $region9
    $region8: #{tpu_custom_call.1} parent=1 // pred_region
      %s13 = ssub.s32 2048, 2048
      %14 = vsyncadd [#allocation3], %s13
      %s15 = sshll.u32 [#allocation2], 4
      %s16 = int_to_ptr.vmem [resolvable:$true] %s15
      %21 = dma.hbm_to_vmem [thread:$0]  %s1, 2048, %s16, [#allocation3], 128, 128, 8
    $region9: #{tpu_custom_call.1} parent=1 // pred_fallthru
      _
    // Predicated region
    $region10: #{tpu_custom_call.1} parent=1 // pred_check
      _
    $region11: #{tpu_custom_call.1} parent=1 // pred_check_branch
      %23 = sbr.rel (0) target = $region13
    $region12: #{tpu_custom_call.1} parent=1 // pred_region
      %24 = dma.done [#allocation3], 2048
    $region13: #{tpu_custom_call.1} parent=1 // pred_fallthru
      _
    %v25 = vld [vmem:[%s0] sm:$0xff]
    %v26 = vld [vmem:[%s0 + $0x8] sm:$0xff]
    %v27 = vld [vmem:[#allocation2] sm:$0xff]
    %v28 = vld [vmem:[#allocation2 + $0x8] sm:$0xff]
    %v29 = vld [vmem:[#allocation2 + $0x10] sm:$0xff]
    %v30 = vld [vmem:[#allocation2 + $0x18] sm:$0xff]
    %v31 = vld [vmem:[#allocation2 + $0x20] sm:$0xff]
    %v32 = vld [vmem:[#allocation2 + $0x28] sm:$0xff]
    %v33 = vld [vmem:[#allocation2 + $0x30] sm:$0xff]
    %v34 = vld [vmem:[#allocation2 + $0x38] sm:$0xff]
    %v35 = vld [vmem:[#allocation2 + $0x40] sm:$0xff]
    %v36 = vld [vmem:[#allocation2 + $0x48] sm:$0xff]
    %v37 = vld [vmem:[#allocation2 + $0x50] sm:$0xff]
    %v38 = vld [vmem:[#allocation2 + $0x58] sm:$0xff]
    %v39 = vld [vmem:[#allocation2 + $0x60] sm:$0xff]
    %v40 = vld [vmem:[#allocation2 + $0x68] sm:$0xff]
    %v41 = vld [vmem:[#allocation2 + $0x70] sm:$0xff]
    %v42 = vld [vmem:[#allocation2 + $0x78] sm:$0xff]
    %v43 = vlaneseq
    %v44 = vand.u32 %v43, 127
    %45 = vset.pattern.permute.xlu0 0
    %46 = vperm.xlu0 %45, %v25
    %v47 = vpop.permute.xlu0 %46
    %48 = vset.pattern.permute.xlu0 0
    %49 = vperm.xlu0 %48, %v26
    %v50 = vpop.permute.xlu0 %49
    %vm51 = vcmp.eq.s32.totalorder %v44, %v47
    %vm52 = vcmp.eq.s32.totalorder %v44, %v50
    %v53 = vsel %vm51, 1, 0
    %v54 = vsel %vm52, 1, 0
    %v55 = vcvt.s32.f32 %v53
    %v56 = vcvt.s32.f32 %v54
    %57 = vmatprep.subr.mxu0 0.0
    %58 = vmatpush1.msra.mxu0 %v27
    %59 = vmatprep.subr.mxu0 0.0
    %60 = vmatpush1.msra.mxu0 %v28
    %61 = vmatprep.subr.mxu0 0.0
    %62 = vmatpush1.msra.mxu0 %v29
    %63 = vmatprep.subr.mxu0 0.0
    %64 = vmatpush1.msra.mxu0 %v30
    %65 = vmatprep.subr.mxu0 0.0
    %66 = vmatpush1.msra.mxu0 %v31
    %67 = vmatprep.subr.mxu0 0.0
    %68 = vmatpush1.msra.mxu0 %v32
    %69 = vmatprep.subr.mxu0 0.0
    %70 = vmatpush1.msra.mxu0 %v33
    %71 = vmatprep.subr.mxu0 0.0
    %72 = vmatpush1.msra.mxu0 %v34
    %73 = vmatprep.subr.mxu0 0.0
    %74 = vmatpush1.msra.mxu0 %v35
    %75 = vmatprep.subr.mxu0 0.0
    %76 = vmatpush1.msra.mxu0 %v36
    %77 = vmatprep.subr.mxu0 0.0
    %78 = vmatpush1.msra.mxu0 %v37
    %79 = vmatprep.subr.mxu0 0.0
    %80 = vmatpush1.msra.mxu0 %v38
    %81 = vmatprep.subr.mxu0 0.0
    %82 = vmatpush1.msra.mxu0 %v39
    %83 = vmatprep.subr.mxu0 0.0
    %84 = vmatpush1.msra.mxu0 %v40
    %85 = vmatprep.subr.mxu0 0.0
    %86 = vmatpush1.msra.mxu0 %v41
    %87 = vmatprep.subr.mxu0 0.0
    %88 = vmatpush1.msra.mxu0 %v42
    %89 = vmatprep.subr.mxu0 0.0
    %90 = vmatpush1.msra.mxu0 0.0
    %91 = vmatprep.subr.mxu0 0.0
    %92 = vmatpush1.msra.mxu0 0.0
    %93 = vmatprep.subr.mxu0 0.0
    %94 = vmatpush1.msra.mxu0 0.0
    %95 = vmatprep.subr.mxu0 0.0
    %96 = vmatpush1.msra.mxu0 0.0
    %97 = vmatprep.subr.mxu0 0.0
    %98 = vmatpush1.msra.mxu0 0.0
    %99 = vmatprep.subr.mxu0 0.0
    %100 = vmatpush1.msra.mxu0 0.0
    %101 = vmatprep.subr.mxu0 0.0
    %102 = vmatpush1.msra.mxu0 0.0
    %103 = vmatprep.subr.mxu0 0.0
    %104 = vmatpush1.msra.mxu0 0.0
    %105 = vmatprep.subr.mxu0 0.0
    %106 = vmatpush1.msra.mxu0 0.0
    %107 = vmatprep.subr.mxu0 0.0
    %108 = vmatpush1.msra.mxu0 0.0
    %109 = vmatprep.subr.mxu0 0.0
    %110 = vmatpush1.msra.mxu0 0.0
    %111 = vmatprep.subr.mxu0 0.0
    %112 = vmatpush1.msra.mxu0 0.0
    %113 = vmatprep.subr.mxu0 0.0
    %114 = vmatpush1.msra.mxu0 0.0
    %115 = vmatprep.subr.mxu0 0.0
    %116 = vmatpush1.msra.mxu0 0.0
    %117 = vmatprep.subr.mxu0 0.0
    %118 = vmatpush1.msra.mxu0 0.0
    %119 = vmatprep.subr.mxu0 0.0
    %120 = vmatpush1.msra.mxu0 0.0
    %121 = vmatprep.mubr.f32.mxu0 0.0
    %122 = vmatmul.mubr.f32.gmra.mrb[0].mxu0 %v55
    %v123 = vpop.f32.mrb[0].mxu0
    %v124 = vadd.f32 0.0, %v123
    %v125 = vpop.f32.mrb[0].mxu0
    %126 = vmatprep.mubr.f32.mxu0 0.0
    %127 = vmatmul.mubr.f32.gmra.mrb[0].mxu0 %v56
    %v128 = vpop.f32.mrb[0].mxu0
    %v129 = vadd.f32 0.0, %v128
    %v130 = vpop.f32.mrb[0].mxu0
    %131 = vdwg.mxu0
    %v132 = vmul.f32 %v124, %v129
    %133 = vadd.xlane.f32.xlu0 %v132
    %v134 = vpop.xlane.xlu0 %133
    %v135 = vmin.f32 %v134, 0.0
    %v136 = vand.u32 2147483647, %v134
    %v137 = vsub.f32 0.0, %v136
    %v138 = vmul.f32 %v137, 1.442695
    %v139 = vpow.pop %v138
    %v140 = vadd.f32 %v139, 1.0
    %v141 = vlog2.pop %v140
    %v142 = vmul.f32 %v141, 0.6931472
    %v143 = vmul.f32 -0.5, %v139
    %v144 = vadd.f32 %v143, 1.0
    %v145 = vmul.f32 %v144, %v139
    %v146 = vand.u32 2147483647, %v139
    %vm147 = vcmp.lt.f32.partialorder %v146, 0.0004427343
    %v148 = vsel %vm147, %v145, %v142
    %v149 = vsub.f32 %v135, %v148
    %vm150 = vcmask 7168
    %151 = vst.msk [vmem:[%s2] sm:$0xff] %vm150, %v149
    // Predicated region
    $region14: #{tpu_custom_call.1} parent=1 // pred_check
      _
    $region15: #{tpu_custom_call.1} parent=1 // pred_check_branch
      %153 = sbr.rel (0) target = $region17
    $region16: #{tpu_custom_call.1} parent=1 // pred_region
      _
    $region17: #{tpu_custom_call.1} parent=1 // pred_fallthru
      _
    // Predicated region
    $region18: #{tpu_custom_call.1} parent=1 // pred_check
      _
    $region19: #{tpu_custom_call.1} parent=1 // pred_check_branch
      %155 = sbr.rel (0) target = $region21
    $region20: #{tpu_custom_call.1} parent=1 // pred_region
      _
    $region21: #{tpu_custom_call.1} parent=1 // pred_fallthru
      _
    %156 = vsyncpa [#allocation3], 1

</llo_original>
